<compile_context>
chip_gen: v7x
topology: tpu7x:2x2x1
jax: 0.10.0
libtpu: 0.0.40
codegen_flags: <defaults>
</compile_context>

<pallas_src>
import jax
import jax.numpy as jnp
from jax.experimental import pallas as pl
from jax.experimental.pallas import tpu as pltpu


def mlp_kernel(x_ref, w1_ref, b1_ref, w2_ref, b2_ref, w3_ref, b3_ref, o_ref):
    cdt = w1_ref.dtype  # compute dtype (f32 or bf16), set once at param-prep time
    # fc1 + relu  (MXU matmul with f32 accumulation; bias add / relu in f32 on VPU)
    h1 = jnp.dot(x_ref[...].astype(cdt), w1_ref[...],
                 preferred_element_type=jnp.float32)
    h1 = jnp.maximum(h1 + b1_ref[...], 0.0)
    # fc2 + relu
    h2 = jnp.dot(h1.astype(cdt), w2_ref[...],
                 preferred_element_type=jnp.float32)
    h2 = jnp.maximum(h2 + b2_ref[...], 0.0)
    # fc3 (no activation), true 24-wide output tile (masked store, no lane pad)
    out = jnp.dot(h2.astype(cdt), w3_ref[...],
                  preferred_element_type=jnp.float32)
    o_ref[...] = (out + b3_ref[...]).astype(o_ref.dtype)


def _round_up(n, m):
    return (n + m - 1) // m * m


def prepare_params(w1, b1, w2, b2, w3, b3, *, compute_dtype=jnp.float32):
    """One-time parameter prep (hoisted out of the per-call wrapper).

    Weights are [in, out] (i.e. the transpose of PyTorch nn.Linear.weight).
    Weights are cast to `compute_dtype` (bf16 recommended on v6e/v7x);
    biases stay f32 so the bias-add/ReLU epilogue runs in f32 on the VPU.
    """
    H = w1.shape[1]
    C = w3.shape[1]
    return (
        w1.astype(compute_dtype),
        b1.reshape(1, H).astype(jnp.float32),
        w2.astype(compute_dtype),
        b2.reshape(1, H).astype(jnp.float32),
        w3.astype(compute_dtype),
        b3.reshape(1, C).astype(jnp.float32),
    )


def hand_gesture_mlp(x, params, *, block_b=512):
    """Forward pass of HandGestureMLP.

    x:      [B, input_size] (any float dtype; cast to compute dtype in-kernel)
    params: tuple from prepare_params()
    Returns [B, num_classes] float32.
    """
    w1, b1, w2, b2, w3, b3 = params
    B, K = x.shape
    H = w1.shape[1]
    C = w3.shape[1]

    # Clamp the batch tile for small batches; keep it a multiple of 8 (sublanes).
    block_b = max(8, min(block_b, _round_up(B, 8)))
    grid = (pl.cdiv(B, block_b),)   # ragged last block handled by Pallas masking

    resident = lambda i: (0, 0)     # same block every step -> stays resident in VMEM

    return pl.pallas_call(
        mlp_kernel,
        out_shape=jax.ShapeDtypeStruct((B, C), jnp.float32),
        grid=grid,
        in_specs=[
            pl.BlockSpec((block_b, K), lambda i: (i, 0)),   # x tile (streamed, K=63 unpadded)
            pl.BlockSpec((K, H), resident),                 # w1  [63, 128]
            pl.BlockSpec((1, H), resident),                 # b1
            pl.BlockSpec((H, H), resident),                 # w2  [128, 128]
            pl.BlockSpec((1, H), resident),                 # b2
            pl.BlockSpec((H, C), resident),                 # w3  [128, 24] (unpadded)
            pl.BlockSpec((1, C), resident),                 # b3
        ],
        out_specs=pl.BlockSpec((block_b, C), lambda i: (i, 0)),
        compiler_params=pltpu.CompilerParams(
            dimension_semantics=("parallel",)),             # megacore sharding on v7x
    )(x, w1, b1, w2, b2, w3, b3)


def reference_mlp(x, w1, b1, w2, b2, w3, b3):
    h1 = jnp.maximum(x @ w1 + b1, 0.0)
    h2 = jnp.maximum(h1 @ w2 + b2, 0.0)
    return h2 @ w3 + b3


if __name__ == "__main__":
    input_size, hidden_size, num_classes = 63, 128, 24

    key = jax.random.PRNGKey(0)
    kx, kx2, k1, k2, k3, kb1, kb2, kb3 = jax.random.split(key, 8)

    s1 = 1.0 / (input_size ** 0.5)
    s2 = 1.0 / (hidden_size ** 0.5)

    # Deterministic synthetic parameters (PyTorch nn.Linear-like scale), [in, out].
    w1 = jax.random.uniform(k1, (input_size, hidden_size), jnp.float32, -s1, s1)
    b1 = jax.random.uniform(kb1, (hidden_size,), jnp.float32, -s1, s1)
    w2 = jax.random.uniform(k2, (hidden_size, hidden_size), jnp.float32, -s2, s2)
    b2 = jax.random.uniform(kb2, (hidden_size,), jnp.float32, -s2, s2)
    w3 = jax.random.uniform(k3, (hidden_size, num_classes), jnp.float32, -s2, s2)
    b3 = jax.random.uniform(kb3, (num_classes,), jnp.float32, -s2, s2)

    # --- f32 path (bit-parity-ish with the reference), batch = 8 ---------------
    x = jax.random.normal(kx, (8, input_size), dtype=jnp.float32)
    params_f32 = prepare_params(w1, b1, w2, b2, w3, b3, compute_dtype=jnp.float32)
    out = jax.block_until_ready(hand_gesture_mlp(x, params_f32))
    ref = reference_mlp(x, w1, b1.reshape(1, -1), w2, b2.reshape(1, -1),
                        w3, b3.reshape(1, -1))
    assert out.shape == (8, num_classes)
    assert jnp.allclose(out, ref, atol=1e-3, rtol=1e-3)

    # --- ragged batch (exercises the partial last block path), batch = 13 ------
    x13 = jax.random.normal(kx2, (13, input_size), dtype=jnp.float32)
    out13 = jax.block_until_ready(hand_gesture_mlp(x13, params_f32))
    ref13 = reference_mlp(x13, w1, b1.reshape(1, -1), w2, b2.reshape(1, -1),
                          w3, b3.reshape(1, -1))
    assert out13.shape == (13, num_classes)
    assert jnp.allclose(out13, ref13, atol=1e-3, rtol=1e-3)

    # --- bf16 streamed-operand fast path (v6e/v7x MXU), looser tolerance -------
    params_bf16 = prepare_params(w1, b1, w2, b2, w3, b3, compute_dtype=jnp.bfloat16)
    out_bf16 = jax.block_until_ready(hand_gesture_mlp(x, params_bf16))
    assert out_bf16.shape == (8, num_classes)
    assert jnp.allclose(out_bf16, ref, atol=5e-2, rtol=5e-2)

    print("KERNEL_OK")
</pallas_src>

<mosaic_0001>
module attributes {stable_mosaic.version = 11 : i64} {
  func.func @mlp_kernel(%arg0: i32, %arg1: memref<8x63xf32, #tpu.memory_space<vmem>>, %arg2: memref<63x128xf32, #tpu.memory_space<vmem>>, %arg3: memref<1x128xf32, #tpu.memory_space<vmem>>, %arg4: memref<128x128xf32, #tpu.memory_space<vmem>>, %arg5: memref<1x128xf32, #tpu.memory_space<vmem>>, %arg6: memref<128x24xf32, #tpu.memory_space<vmem>>, %arg7: memref<1x24xf32, #tpu.memory_space<vmem>>, %arg8: memref<8x24xf32, #tpu.memory_space<vmem>>) attributes {dimension_semantics = [#tpu.dimension_semantics<parallel>], iteration_bounds = array<i64: 1>, scalar_prefetch = 0 : i64, scratch_operands = 0 : i64, tpu.core_type = #tpu.core_type<tc>, window_params = [{transform_indices = @transform_0, window_bounds = array<i64: 8, 63>}, {pipeline_mode = #tpu.pipeline_mode<synchronous>, transform_indices = @transform_1, window_bounds = array<i64: 63, 128>}, {pipeline_mode = #tpu.pipeline_mode<synchronous>, transform_indices = @transform_2, window_bounds = array<i64: 1, 128>}, {pipeline_mode = #tpu.pipeline_mode<synchronous>, transform_indices = @transform_3, window_bounds = array<i64: 128, 128>}, {pipeline_mode = #tpu.pipeline_mode<synchronous>, transform_indices = @transform_4, window_bounds = array<i64: 1, 128>}, {pipeline_mode = #tpu.pipeline_mode<synchronous>, transform_indices = @transform_5, window_bounds = array<i64: 128, 24>}, {pipeline_mode = #tpu.pipeline_mode<synchronous>, transform_indices = @transform_6, window_bounds = array<i64: 1, 24>}, {transform_indices = @transform_7, window_bounds = array<i64: 8, 24>}]} {
    %c0 = arith.constant 0 : index
    %c0_0 = arith.constant 0 : index
    %0 = vector.load %arg1[%c0, %c0_0] : memref<8x63xf32, #tpu.memory_space<vmem>>, vector<8x63xf32>
    %c0_1 = arith.constant 0 : index
    %c0_2 = arith.constant 0 : index
    %1 = vector.load %arg2[%c0_1, %c0_2] : memref<63x128xf32, #tpu.memory_space<vmem>>, vector<63x128xf32>
    %cst = arith.constant dense<0.000000e+00> : vector<8x128xf32>
    %2 = tpu.matmul %0, %1, %cst {dimension_numbers = #tpu.dot_dimension_numbers<[1], [0], [0], [1], [0, 0, 1, 1], [], []>} : vector<8x63xf32>, vector<63x128xf32>, vector<8x128xf32> -> vector<8x128xf32>
    %c0_3 = arith.constant 0 : index
    %c0_4 = arith.constant 0 : index
    %3 = vector.load %arg3[%c0_3, %c0_4] : memref<1x128xf32, #tpu.memory_space<vmem>>, vector<1x128xf32>
    %4 = vector.broadcast %3 : vector<1x128xf32> to vector<8x128xf32>
    %5 = arith.addf %2, %4 : vector<8x128xf32>
    %cst_5 = arith.constant 0.000000e+00 : f32
    %6 = vector.broadcast %cst_5 : f32 to vector<8x128xf32>
    %7 = arith.maximumf %5, %6 : vector<8x128xf32>
    %c0_6 = arith.constant 0 : index
    %c0_7 = arith.constant 0 : index
    %8 = vector.load %arg4[%c0_6, %c0_7] : memref<128x128xf32, #tpu.memory_space<vmem>>, vector<128x128xf32>
    %cst_8 = arith.constant dense<0.000000e+00> : vector<8x128xf32>
    %9 = tpu.matmul %7, %8, %cst_8 {dimension_numbers = #tpu.dot_dimension_numbers<[1], [0], [0], [1], [0, 0, 1, 1], [], []>} : vector<8x128xf32>, vector<128x128xf32>, vector<8x128xf32> -> vector<8x128xf32>
    %c0_9 = arith.constant 0 : index
    %c0_10 = arith.constant 0 : index
    %10 = vector.load %arg5[%c0_9, %c0_10] : memref<1x128xf32, #tpu.memory_space<vmem>>, vector<1x128xf32>
    %11 = vector.broadcast %10 : vector<1x128xf32> to vector<8x128xf32>
    %12 = arith.addf %9, %11 : vector<8x128xf32>
    %cst_11 = arith.constant 0.000000e+00 : f32
    %13 = vector.broadcast %cst_11 : f32 to vector<8x128xf32>
    %14 = arith.maximumf %12, %13 : vector<8x128xf32>
    %c0_12 = arith.constant 0 : index
    %c0_13 = arith.constant 0 : index
    %15 = vector.load %arg6[%c0_12, %c0_13] : memref<128x24xf32, #tpu.memory_space<vmem>>, vector<128x24xf32>
    %cst_14 = arith.constant dense<0.000000e+00> : vector<8x24xf32>
    %16 = tpu.matmul %14, %15, %cst_14 {dimension_numbers = #tpu.dot_dimension_numbers<[1], [0], [0], [1], [0, 0, 1, 1], [], []>} : vector<8x128xf32>, vector<128x24xf32>, vector<8x24xf32> -> vector<8x24xf32>
    %c0_15 = arith.constant 0 : index
    %c0_16 = arith.constant 0 : index
    %17 = vector.load %arg7[%c0_15, %c0_16] : memref<1x24xf32, #tpu.memory_space<vmem>>, vector<1x24xf32>
    %18 = vector.broadcast %17 : vector<1x24xf32> to vector<8x24xf32>
    %19 = arith.addf %16, %18 : vector<8x24xf32>
    %c0_17 = arith.constant 0 : index
    %c0_18 = arith.constant 0 : index
    %20 = vector.load %arg8[%c0_17, %c0_18] : memref<8x24xf32, #tpu.memory_space<vmem>>, vector<8x24xf32>
    tpu.vector_store %arg8[%c0_17, %c0_18], %19 {strides = array<i32>} : memref<8x24xf32, #tpu.memory_space<vmem>>, vector<8x24xf32>,
    return
  }
  func.func @transform_0(%arg0: i32) -> (i32, i32) {
    %c0_i32 = arith.constant 0 : i32
    %c0_i32_0 = arith.constant 0 : i32
    return %arg0, %c0_i32 : i32, i32
  }
  func.func @transform_1(%arg0: i32) -> (i32, i32) {
    %c0_i32 = arith.constant 0 : i32
    %c0_i32_0 = arith.constant 0 : i32
    %c0_i32_1 = arith.constant 0 : i32
    return %c0_i32, %c0_i32_0 : i32, i32
  }
  func.func @transform_2(%arg0: i32) -> (i32, i32) {
    %c0_i32 = arith.constant 0 : i32
    %c0_i32_0 = arith.constant 0 : i32
    %c0_i32_1 = arith.constant 0 : i32
    return %c0_i32, %c0_i32_0 : i32, i32
  }
  func.func @transform_3(%arg0: i32) -> (i32, i32) {
    %c0_i32 = arith.constant 0 : i32
    %c0_i32_0 = arith.constant 0 : i32
    %c0_i32_1 = arith.constant 0 : i32
    return %c0_i32, %c0_i32_0 : i32, i32
  }
  func.func @transform_4(%arg0: i32) -> (i32, i32) {
    %c0_i32 = arith.constant 0 : i32
    %c0_i32_0 = arith.constant 0 : i32
    %c0_i32_1 = arith.constant 0 : i32
    return %c0_i32, %c0_i32_0 : i32, i32
  }
  func.func @transform_5(%arg0: i32) -> (i32, i32) {
    %c0_i32 = arith.constant 0 : i32
    %c0_i32_0 = arith.constant 0 : i32
    %c0_i32_1 = arith.constant 0 : i32
    return %c0_i32, %c0_i32_0 : i32, i32
  }
  func.func @transform_6(%arg0: i32) -> (i32, i32) {
    %c0_i32 = arith.constant 0 : i32
    %c0_i32_0 = arith.constant 0 : i32
    %c0_i32_1 = arith.constant 0 : i32
    return %c0_i32, %c0_i32_0 : i32, i32
  }
  func.func @transform_7(%arg0: i32) -> (i32, i32) {
    %c0_i32 = arith.constant 0 : i32
    %c0_i32_0 = arith.constant 0 : i32
    return %arg0, %c0_i32 : i32, i32
  }
}

</mosaic_0001>

<llo_original>
// kernel: tpu_custom_call.1
$region0: #{tpu_custom_call.1}
  #allocation0 [shape = 'u32[]', space=smem, size = 0x4, offset = 0x4, fixed_abs, tag = 'smem constant byte address 0x4 - core index']
  #allocation1 [shape = 'u32[144,128]{1,0:T(1,128)}', space=vmem, size = 0x12000, scoped, tag = 'internal scratch']
  %s0 = inlined_call_operand.vmem [shape: f32[8,63], index: 0, kind: input, shape index: {}]
  %s1 = inlined_call_operand.hbm [shape: f32[63,128], index: 1, kind: input, shape index: {}]
  %s2 = inlined_call_operand.vmem [shape: f32[1,128], index: 2, kind: input, shape index: {}]
  %s3 = inlined_call_operand.vmem [shape: f32[128,128], index: 3, kind: input, shape index: {}]
  %s4 = inlined_call_operand.vmem [shape: f32[1,128], index: 4, kind: input, shape index: {}]
  %s5 = inlined_call_operand.vmem [shape: f32[128,24], index: 5, kind: input, shape index: {}]
  %s6 = inlined_call_operand.vmem [shape: f32[1,24], index: 6, kind: input, shape index: {}]
  %s7 = inlined_call_operand.hbm [shape: f32[8,24], index: 7, kind: output, shape index: {}]
  %s8 = sld [smem:[#allocation0]]
  $region42: #{tpu_custom_call.1} parent=0
    _
  %s10 = ssub.s32 1, %s8
  %s11 = scalar_select 0, %s10, %s8
  $region1: #{tpu_custom_call.1} parent=0
    #allocation2 [shape = 'u8[32768]{0}', space=vmem, size = 0x8000, scoped, tag = 'input window, operand 1, single buffered']
    #allocation3 [shape = 's32[1]{0}', space=sflag, size = 0x4, scoped, tag = 'scoped memory for tpu_custom_call.1']
    #allocation4 [shape = 's32[1]{0}', space=sflag, size = 0x4, scoped, tag = 'scoped memory for tpu_custom_call.1']
    #allocation5 [shape = 'u8[4096]{0}', space=vmem, size = 0x1000, scoped, tag = 'output window, operand 0, single buffered']
    %12 = vsyncpa [#allocation3], 0
    %13 = vsyncpa [#allocation4], 0
    // Predicated region
    $region2: #{tpu_custom_call.1} parent=1 // pred_check
      _
    $region3: #{tpu_custom_call.1} parent=1 // pred_check_branch
      %15 = sbr.rel (0) target = $region5
    $region4: #{tpu_custom_call.1} parent=1 // pred_region
      _
    $region5: #{tpu_custom_call.1} parent=1 // pred_fallthru
      _
    // Predicated region
    $region6: #{tpu_custom_call.1} parent=1 // pred_check
      _
    $region7: #{tpu_custom_call.1} parent=1 // pred_check_branch
      %17 = sbr.rel (0) target = $region9
    $region8: #{tpu_custom_call.1} parent=1 // pred_region
      %s19 = ssub.s32 1024, 1024
      %20 = vsyncadd [#allocation3], %s19
      %s21 = sshll.u32 [#allocation2], 4
      %s22 = int_to_ptr.vmem [resolvable:$true] %s21
      %27 = dma.hbm_to_vmem [thread:$0]  %s1, 1024, %s22, [#allocation3], 128, 128, 8
    $region9: #{tpu_custom_call.1} parent=1 // pred_fallthru
      _
    // Predicated region
    $region10: #{tpu_custom_call.1} parent=1 // pred_check
      _
    $region11: #{tpu_custom_call.1} parent=1 // pred_check_branch
      %29 = sbr.rel (0) target = $region13
    $region12: #{tpu_custom_call.1} parent=1 // pred_region
      _
    $region13: #{tpu_custom_call.1} parent=1 // pred_fallthru
      _
    // Predicated region
    $region14: #{tpu_custom_call.1} parent=1 // pred_check
      _
    $region15: #{tpu_custom_call.1} parent=1 // pred_check_branch
      %31 = sbr.rel (0) target = $region17
    $region16: #{tpu_custom_call.1} parent=1 // pred_region
      _
    $region17: #{tpu_custom_call.1} parent=1 // pred_fallthru
      _
    // Predicated region
    $region18: #{tpu_custom_call.1} parent=1 // pred_check
      _
    $region19: #{tpu_custom_call.1} parent=1 // pred_check_branch
      %33 = sbr.rel (0) target = $region21
    $region20: #{tpu_custom_call.1} parent=1 // pred_region
      _
    $region21: #{tpu_custom_call.1} parent=1 // pred_fallthru
      _
    // Predicated region
    $region22: #{tpu_custom_call.1} parent=1 // pred_check
      _
    $region23: #{tpu_custom_call.1} parent=1 // pred_check_branch
      %35 = sbr.rel (0) target = $region25
    $region24: #{tpu_custom_call.1} parent=1 // pred_region
      _
    $region25: #{tpu_custom_call.1} parent=1 // pred_fallthru
      _
    // Predicated region
    $region26: #{tpu_custom_call.1} parent=1 // pred_check
      _
    $region27: #{tpu_custom_call.1} parent=1 // pred_check_branch
      %37 = sbr.rel (0) target = $region29
    $region28: #{tpu_custom_call.1} parent=1 // pred_region
      _
    $region29: #{tpu_custom_call.1} parent=1 // pred_fallthru
      _
    // Predicated region
    $region30: #{tpu_custom_call.1} parent=1 // pred_check
      _
    $region31: #{tpu_custom_call.1} parent=1 // pred_check_branch
      %39 = sbr.rel (0) target = $region33
    $region32: #{tpu_custom_call.1} parent=1 // pred_region
      %40 = dma.done [#allocation3], 1024
    $region33: #{tpu_custom_call.1} parent=1 // pred_fallthru
      _
    %v41 = vld [vmem:[%s0] sm:$0xff]
    %v42 = vld [vmem:[#allocation2] sm:$0xff]
    %v43 = vld [vmem:[#allocation2 + $0x8] sm:$0xff]
    %v44 = vld [vmem:[#allocation2 + $0x10] sm:$0xff]
    %v45 = vld [vmem:[#allocation2 + $0x18] sm:$0xff]
    %v46 = vld [vmem:[#allocation2 + $0x20] sm:$0xff]
    %v47 = vld [vmem:[#allocation2 + $0x28] sm:$0xff]
    %v48 = vld [vmem:[#allocation2 + $0x30] sm:$0xff]
    %v49 = vld [vmem:[#allocation2 + $0x38] sm:$0x7f]
    %v50 = vld [vmem:[%s2] sm:$0x1]
    %v52 = vlaneseq
    %v53 = vshrl.u32 %v52, 7
    %v54 = vsub.s32 0, %v53
    %v55 = vrot.slane %v50, %v54
    %vm57 = vcmask 515072
    %v59 = vsel %vm57, %v41, 0
    %vm61 = vcmask 1046528
    %v63 = vsel %vm61, %v49, 0
    %65 = vmatprep.subr.mxu0 0.0
    %66 = vmatpush1.msra.mxu0 %v42
    %67 = vmatprep.subr.mxu0 0.0
    %68 = vmatpush1.msra.mxu0 %v43
    %69 = vmatprep.subr.mxu0 0.0
    %70 = vmatpush1.msra.mxu0 %v44
    %71 = vmatprep.subr.mxu0 0.0
    %72 = vmatpush1.msra.mxu0 %v45
    %73 = vmatprep.subr.mxu0 0.0
    %74 = vmatpush1.msra.mxu0 %v46
    %75 = vmatprep.subr.mxu0 0.0
    %76 = vmatpush1.msra.mxu0 %v47
    %77 = vmatprep.subr.mxu0 0.0
    %78 = vmatpush1.msra.mxu0 %v48
    %79 = vmatprep.subr.mxu0 0.0
    %80 = vmatpush1.msra.mxu0 %v63
    %81 = vmatprep.subr.mxu0 0.0
    %82 = vmatpush1.msra.mxu0 0.0
    %83 = vmatprep.subr.mxu0 0.0
    %84 = vmatpush1.msra.mxu0 0.0
    %85 = vmatprep.subr.mxu0 0.0
    %86 = vmatpush1.msra.mxu0 0.0
    %87 = vmatprep.subr.mxu0 0.0
    %88 = vmatpush1.msra.mxu0 0.0
    %89 = vmatprep.subr.mxu0 0.0
    %90 = vmatpush1.msra.mxu0 0.0
    %91 = vmatprep.subr.mxu0 0.0
    %92 = vmatpush1.msra.mxu0 0.0
    %93 = vmatprep.subr.mxu0 0.0
    %94 = vmatpush1.msra.mxu0 0.0
    %95 = vmatprep.subr.mxu0 0.0
    %96 = vmatpush1.msra.mxu0 0.0
    %97 = vmatprep.subr.mxu0 0.0
    %98 = vmatpush1.msra.mxu0 0.0
    %99 = vmatprep.subr.mxu0 0.0
    %100 = vmatpush1.msra.mxu0 0.0
    %101 = vmatprep.subr.mxu0 0.0
    %102 = vmatpush1.msra.mxu0 0.0
    %103 = vmatprep.subr.mxu0 0.0
    %104 = vmatpush1.msra.mxu0 0.0
    %105 = vmatprep.subr.mxu0 0.0
    %106 = vmatpush1.msra.mxu0 0.0
    %107 = vmatprep.subr.mxu0 0.0
    %108 = vmatpush1.msra.mxu0 0.0
    %109 = vmatprep.subr.mxu0 0.0
    %110 = vmatpush1.msra.mxu0 0.0
    %111 = vmatprep.subr.mxu0 0.0
    %112 = vmatpush1.msra.mxu0 0.0
    %113 = vmatprep.subr.mxu0 0.0
    %114 = vmatpush1.msra.mxu0 0.0
    %115 = vmatprep.subr.mxu0 0.0
    %116 = vmatpush1.msra.mxu0 0.0
    %117 = vmatprep.subr.mxu0 0.0
    %118 = vmatpush1.msra.mxu0 0.0
    %119 = vmatprep.subr.mxu0 0.0
    %120 = vmatpush1.msra.mxu0 0.0
    %121 = vmatprep.subr.mxu0 0.0
    %122 = vmatpush1.msra.mxu0 0.0
    %123 = vmatprep.subr.mxu0 0.0
    %124 = vmatpush1.msra.mxu0 0.0
    %125 = vmatprep.subr.mxu0 0.0
    %126 = vmatpush1.msra.mxu0 0.0
    %127 = vmatprep.subr.mxu0 0.0
    %128 = vmatpush1.msra.mxu0 0.0
    %129 = vmatprep.mubr.f32.mxu0 0.0
    %130 = vmatmul.mubr.f32.gmra.mrb[0].mxu0 %v59
    %v131 = vpop.f32.mrb[0].mxu0
    %v132 = vadd.f32 %v55, %v131
    %v133 = vpop.f32.mrb[0].mxu0
    %134 = vdwg.mxu0
    %v135 = vmax.f32 %v132, 0.0
    %v136 = vld [vmem:[%s3] sm:$0xff]
    %v137 = vld [vmem:[%s3 + $0x8] sm:$0xff]
    %v138 = vld [vmem:[%s3 + $0x10] sm:$0xff]
    %v139 = vld [vmem:[%s3 + $0x18] sm:$0xff]
    %v140 = vld [vmem:[%s3 + $0x20] sm:$0xff]
    %v141 = vld [vmem:[%s3 + $0x28] sm:$0xff]
    %v142 = vld [vmem:[%s3 + $0x30] sm:$0xff]
    %v143 = vld [vmem:[%s3 + $0x38] sm:$0xff]
    %v144 = vld [vmem:[%s3 + $0x40] sm:$0xff]
    %v145 = vld [vmem:[%s3 + $0x48] sm:$0xff]
    %v146 = vld [vmem:[%s3 + $0x50] sm:$0xff]
    %v147 = vld [vmem:[%s3 + $0x58] sm:$0xff]
    %v148 = vld [vmem:[%s3 + $0x60] sm:$0xff]
    %v149 = vld [vmem:[%s3 + $0x68] sm:$0xff]
    %v150 = vld [vmem:[%s3 + $0x70] sm:$0xff]
    %v151 = vld [vmem:[%s3 + $0x78] sm:$0xff]
    %v152 = vld [vmem:[%s4] sm:$0x1]
    %v154 = vlaneseq
    %v155 = vshrl.u32 %v154, 7
    %v156 = vsub.s32 0, %v155
    %v157 = vrot.slane %v152, %v156
    %159 = vmatprep.subr.mxu0 0.0
    %160 = vmatpush1.msra.mxu0 %v136
    %161 = vmatprep.subr.mxu0 0.0
    %162 = vmatpush1.msra.mxu0 %v137
    %163 = vmatprep.subr.mxu0 0.0
    %164 = vmatpush1.msra.mxu0 %v138
    %165 = vmatprep.subr.mxu0 0.0
    %166 = vmatpush1.msra.mxu0 %v139
    %167 = vmatprep.subr.mxu0 0.0
    %168 = vmatpush1.msra.mxu0 %v140
    %169 = vmatprep.subr.mxu0 0.0
    %170 = vmatpush1.msra.mxu0 %v141
    %171 = vmatprep.subr.mxu0 0.0
    %172 = vmatpush1.msra.mxu0 %v142
    %173 = vmatprep.subr.mxu0 0.0
    %174 = vmatpush1.msra.mxu0 %v143
    %175 = vmatprep.subr.mxu0 0.0
    %176 = vmatpush1.msra.mxu0 %v144
    %177 = vmatprep.subr.mxu0 0.0
    %178 = vmatpush1.msra.mxu0 %v145
    %179 = vmatprep.subr.mxu0 0.0
    %180 = vmatpush1.msra.mxu0 %v146
    %181 = vmatprep.subr.mxu0 0.0
    %182 = vmatpush1.msra.mxu0 %v147
    %183 = vmatprep.subr.mxu0 0.0
    %184 = vmatpush1.msra.mxu0 %v148
    %185 = vmatprep.subr.mxu0 0.0
    %186 = vmatpush1.msra.mxu0 %v149
    %187 = vmatprep.subr.mxu0 0.0
    %188 = vmatpush1.msra.mxu0 %v150
    %189 = vmatprep.subr.mxu0 0.0
    %190 = vmatpush1.msra.mxu0 %v151
    %191 = vmatprep.subr.mxu0 0.0
    %192 = vmatpush1.msra.mxu0 0.0
    %193 = vmatprep.subr.mxu0 0.0
    %194 = vmatpush1.msra.mxu0 0.0
    %195 = vmatprep.subr.mxu0 0.0
    %196 = vmatpush1.msra.mxu0 0.0
    %197 = vmatprep.subr.mxu0 0.0
    %198 = vmatpush1.msra.mxu0 0.0
    %199 = vmatprep.subr.mxu0 0.0
    %200 = vmatpush1.msra.mxu0 0.0
    %201 = vmatprep.subr.mxu0 0.0
    %202 = vmatpush1.msra.mxu0 0.0
    %203 = vmatprep.subr.mxu0 0.0
    %204 = vmatpush1.msra.mxu0 0.0
    %205 = vmatprep.subr.mxu0 0.0
    %206 = vmatpush1.msra.mxu0 0.0
    %207 = vmatprep.subr.mxu0 0.0
    %208 = vmatpush1.msra.mxu0 0.0
    %209 = vmatprep.subr.mxu0 0.0
    %210 = vmatpush1.msra.mxu0 0.0
    %211 = vmatprep.subr.mxu0 0.0
    %212 = vmatpush1.msra.mxu0 0.0
    %213 = vmatprep.subr.mxu0 0.0
    %214 = vmatpush1.msra.mxu0 0.0
    %215 = vmatprep.subr.mxu0 0.0
    %216 = vmatpush1.msra.mxu0 0.0
    %217 = vmatprep.subr.mxu0 0.0
    %218 = vmatpush1.msra.mxu0 0.0
    %219 = vmatprep.subr.mxu0 0.0
    %220 = vmatpush1.msra.mxu0 0.0
    %221 = vmatprep.subr.mxu0 0.0
    %222 = vmatpush1.msra.mxu0 0.0
    %223 = vmatprep.mubr.f32.mxu0 0.0
    %224 = vmatmul.mubr.f32.gmra.mrb[0].mxu0 %v135
    %v225 = vpop.f32.mrb[0].mxu0
    %v226 = vadd.f32 %v157, %v225
    %v227 = vpop.f32.mrb[0].mxu0
    %228 = vdwg.mxu0
    %v229 = vmax.f32 %v226, 0.0
    %v230 = vld [vmem:[%s5] sm:$0xff]
    %v231 = vld [vmem:[%s5 + $0x8] sm:$0xff]
    %v232 = vld [vmem:[%s5 + $0x10] sm:$0xff]
    %v233 = vld [vmem:[%s5 + $0x18] sm:$0xff]
    %v234 = vld [vmem:[%s5 + $0x20] sm:$0xff]
    %v235 = vld [vmem:[%s5 + $0x28] sm:$0xff]
    %v236 = vld [vmem:[%s5 + $0x30] sm:$0xff]
    %v237 = vld [vmem:[%s5 + $0x38] sm:$0xff]
    %v238 = vld [vmem:[%s5 + $0x40] sm:$0xff]
    %v239 = vld [vmem:[%s5 + $0x48] sm:$0xff]
    %v240 = vld [vmem:[%s5 + $0x50] sm:$0xff]
    %v241 = vld [vmem:[%s5 + $0x58] sm:$0xff]
    %v242 = vld [vmem:[%s5 + $0x60] sm:$0xff]
    %v243 = vld [vmem:[%s5 + $0x68] sm:$0xff]
    %v244 = vld [vmem:[%s5 + $0x70] sm:$0xff]
    %v245 = vld [vmem:[%s5 + $0x78] sm:$0xff]
    %v246 = vld [vmem:[%s6] sm:$0x1]
    %v248 = vlaneseq
    %v249 = vshrl.u32 %v248, 7
    %v250 = vsub.s32 0, %v249
    %v251 = vrot.slane %v246, %v250
    %253 = vmatprep.subr.mxu0 0.0
    %254 = vmatpush1.msra.mxu0 %v230
    %255 = vmatprep.subr.mxu0 0.0
    %256 = vmatpush1.msra.mxu0 %v231
    %257 = vmatprep.subr.mxu0 0.0
    %258 = vmatpush1.msra.mxu0 %v232
    %259 = vmatprep.subr.mxu0 0.0
    %260 = vmatpush1.msra.mxu0 %v233
    %261 = vmatprep.subr.mxu0 0.0
    %262 = vmatpush1.msra.mxu0 %v234
    %263 = vmatprep.subr.mxu0 0.0
    %264 = vmatpush1.msra.mxu0 %v235
    %265 = vmatprep.subr.mxu0 0.0
    %266 = vmatpush1.msra.mxu0 %v236
    %267 = vmatprep.subr.mxu0 0.0
    %268 = vmatpush1.msra.mxu0 %v237
    %269 = vmatprep.subr.mxu0 0.0
    %270 = vmatpush1.msra.mxu0 %v238
    %271 = vmatprep.subr.mxu0 0.0
    %272 = vmatpush1.msra.mxu0 %v239
    %273 = vmatprep.subr.mxu0 0.0
    %274 = vmatpush1.msra.mxu0 %v240
    %275 = vmatprep.subr.mxu0 0.0
    %276 = vmatpush1.msra.mxu0 %v241
    %277 = vmatprep.subr.mxu0 0.0
    %278 = vmatpush1.msra.mxu0 %v242
    %279 = vmatprep.subr.mxu0 0.0
    %280 = vmatpush1.msra.mxu0 %v243
    %281 = vmatprep.subr.mxu0 0.0
    %282 = vmatpush1.msra.mxu0 %v244
    %283 = vmatprep.subr.mxu0 0.0
    %284 = vmatpush1.msra.mxu0 %v245
    %285 = vmatprep.subr.mxu0 0.0
    %286 = vmatpush1.msra.mxu0 0.0
    %287 = vmatprep.subr.mxu0 0.0
    %288 = vmatpush1.msra.mxu0 0.0
    %289 = vmatprep.subr.mxu0 0.0
    %290 = vmatpush1.msra.mxu0 0.0
    %291 = vmatprep.subr.mxu0 0.0
    %292 = vmatpush1.msra.mxu0 0.0
    %293 = vmatprep.subr.mxu0 0.0
    %294 = vmatpush1.msra.mxu0 0.0
    %295 = vmatprep.subr.mxu0 0.0
    %296 = vmatpush1.msra.mxu0 0.0
    %297 = vmatprep.subr.mxu0 0.0
    %298 = vmatpush1.msra.mxu0 0.0
    %299 = vmatprep.subr.mxu0 0.0
    %300 = vmatpush1.msra.mxu0 0.0
    %301 = vmatprep.subr.mxu0 0.0
    %302 = vmatpush1.msra.mxu0 0.0
    %303 = vmatprep.subr.mxu0 0.0
    %304 = vmatpush1.msra.mxu0 0.0
    %305 = vmatprep.subr.mxu0 0.0
    %306 = vmatpush1.msra.mxu0 0.0
    %307 = vmatprep.subr.mxu0 0.0
    %308 = vmatpush1.msra.mxu0 0.0
    %309 = vmatprep.subr.mxu0 0.0
    %310 = vmatpush1.msra.mxu0 0.0
    %311 = vmatprep.subr.mxu0 0.0
    %312 = vmatpush1.msra.mxu0 0.0
    %313 = vmatprep.subr.mxu0 0.0
    %314 = vmatpush1.msra.mxu0 0.0
    %315 = vmatprep.subr.mxu0 0.0
    %316 = vmatpush1.msra.mxu0 0.0
    %317 = vmatprep.mubr.f32.mxu0 0.0
    %318 = vmatmul.mubr.f32.gmra.mrb[0].mxu0 %v229
    %v319 = vpop.f32.mrb[0].mxu0
    %v320 = vadd.f32 %v251, %v319
    %v321 = vpop.f32.mrb[0].mxu0
    %322 = vdwg.mxu0
    %vm323 = vcmask 195584
    %324 = vst.msk [vmem:[#allocation5] sm:$0xff] %vm323, %v320
    // Predicated region
    $region34: #{tpu_custom_call.1} parent=1 // pred_check
      _
    $region35: #{tpu_custom_call.1} parent=1 // pred_check_branch
      %326 = sbr.rel (0) target = $region37
    $region36: #{tpu_custom_call.1} parent=1 // pred_region
      %s328 = ssub.s32 128, 128
      %329 = vsyncadd [#allocation4], %s328
      %s331 = sshll.u32 [#allocation5], 4
      %s332 = int_to_ptr.vmem [resolvable:$true] %s331
      %334 = dma.vmem_to_hbm [thread:$0]  %s332, 128, %s7, [#allocation4]
    $region37: #{tpu_custom_call.1} parent=1 // pred_fallthru
      _
    // Predicated region
    $region38: #{tpu_custom_call.1} parent=1 // pred_check
      _
    $region39: #{tpu_custom_call.1} parent=1 // pred_check_branch
      %336 = sbr.rel (0) target = $region41
    $region40: #{tpu_custom_call.1} parent=1 // pred_region
      %337 = dma.done [#allocation4], 128
    $region41: #{tpu_custom_call.1} parent=1 // pred_fallthru
      _
    %338 = vsyncpa [#allocation3], 1
    %339 = vsyncpa [#allocation4], 1

</llo_original>
